<compile_context>
chip_gen: v7x
topology: tpu7x:2x2x1
jax: 0.10.0
libtpu: 0.0.40
codegen_flags: <defaults>
</compile_context>

<pallas_src>
import jax
import jax.numpy as jnp
from jax.experimental import pallas as pl
from jax.experimental.pallas import tpu as pltpu

IN_FEATURES = 512
HIDDEN = 256
OUT_FEATURES = 3
OUT_PAD = 128   # lane-dense output width (kills masked partial stores)
TB_MAX = 1024   # batch-tile cap: fits default scoped VMEM on v5e/v6e/v7x


def _round_up(n, m):
    return ((n + m - 1) // m) * m


def _mlp_kernel(x_ref, w1_ref, b1_ref, w2_ref, b2_ref, o_ref):
    # In-kernel f32 -> bf16 cast of the streamed x tile.
    x = x_ref[...].astype(jnp.bfloat16)
    # Layer 1: Linear(512 -> 256).  bf16 inputs, f32 accumulation on the MXU.
    h = jnp.dot(x, w1_ref[...], preferred_element_type=jnp.float32) + b1_ref[...]
    # LeakyReLU (PyTorch default negative_slope = 0.01)
    h = jnp.where(h > 0, h, 0.01 * h)
    # Dropout -> identity (eval mode)
    # Layer 2: Linear(256 -> 3), lane-padded to 128 outputs; bf16 single MXU pass.
    out = jnp.dot(h.astype(jnp.bfloat16), w2_ref[...],
                  preferred_element_type=jnp.float32) + b2_ref[...]
    o_ref[...] = out.astype(o_ref.dtype)


def my_network_forward(x, w1, b1, w2, b2):
    """x: any shape whose total size is divisible by 512 (x.view(-1, 512))."""
    assert x.size % IN_FEATURES == 0, "input cannot be viewed as (-1, 512)"
    x2 = x.reshape(-1, IN_FEATURES)
    B = x2.shape[0]

    # Batch tiling: bounded padding (<16 rows per tile), at least 2 tiles when
    # B > 256 so megacore sharding ("parallel" batch axis) uses both v7x TCs.
    num_tiles = max(pl.cdiv(B, TB_MAX), 2 if B > 256 else 1)
    TB = _round_up(pl.cdiv(B, num_tiles), 16)
    Bp = num_tiles * TB
    if Bp != B:
        x2 = jnp.pad(x2, ((0, Bp - B), (0, 0)))

    # Weight-side prep in the wrapper (tiny arrays; x itself stays f32 and is
    # cast inside the kernel to avoid an extra full pass over x in HBM).
    w1_bf = w1.astype(jnp.bfloat16)
    w2_pad = jnp.zeros((HIDDEN, OUT_PAD), jnp.bfloat16)
    w2_pad = w2_pad.at[:, :OUT_FEATURES].set(w2.astype(jnp.bfloat16))
    b2_pad = jnp.zeros((1, OUT_PAD), jnp.float32)
    b2_pad = b2_pad.at[:, :OUT_FEATURES].set(b2.astype(jnp.float32))

    flops = 2 * Bp * IN_FEATURES * HIDDEN + 2 * Bp * HIDDEN * OUT_PAD
    bytes_accessed = (
        Bp * IN_FEATURES * 4            # x (f32, streamed)
        + IN_FEATURES * HIDDEN * 2      # w1 (bf16, resident)
        + HIDDEN * 4                    # b1
        + HIDDEN * OUT_PAD * 2          # w2 (bf16, resident)
        + OUT_PAD * 4                   # b2
        + Bp * OUT_PAD * 4              # out (lane-padded)
    )

    out = pl.pallas_call(
        _mlp_kernel,
        out_shape=jax.ShapeDtypeStruct((Bp, OUT_PAD), jnp.float32),
        grid_spec=pl.GridSpec(
            grid=(num_tiles,),
            in_specs=[
                pl.BlockSpec((TB, IN_FEATURES), lambda i: (i, 0)),        # x: streamed
                pl.BlockSpec((IN_FEATURES, HIDDEN), lambda i: (0, 0)),    # w1: resident
                pl.BlockSpec((1, HIDDEN), lambda i: (0, 0)),              # b1: resident
                pl.BlockSpec((HIDDEN, OUT_PAD), lambda i: (0, 0)),        # w2: resident
                pl.BlockSpec((1, OUT_PAD), lambda i: (0, 0)),             # b2: resident
            ],
            out_specs=pl.BlockSpec((TB, OUT_PAD), lambda i: (i, 0)),
        ),
        compiler_params=pltpu.CompilerParams(
            dimension_semantics=("parallel",),
        ),
        cost_estimate=pl.CostEstimate(
            flops=flops, transcendentals=0, bytes_accessed=bytes_accessed),
    )(x2, w1_bf, b1, w2_pad, b2_pad)
    return out[:B, :OUT_FEATURES]


def init_params(key):
    """Deterministic init mimicking PyTorch Linear default (uniform ~ 1/sqrt(fan_in))."""
    k1, k2, k3, k4 = jax.random.split(key, 4)
    bound1 = 1.0 / jnp.sqrt(512.0)
    bound2 = 1.0 / jnp.sqrt(256.0)
    # Stored pre-transposed: [in_features, out_features]
    w1 = jax.random.uniform(k1, (IN_FEATURES, HIDDEN), jnp.float32, -bound1, bound1)
    b1 = jax.random.uniform(k2, (1, HIDDEN), jnp.float32, -bound1, bound1)
    w2 = jax.random.uniform(k3, (HIDDEN, OUT_FEATURES), jnp.float32, -bound2, bound2)
    b2 = jax.random.uniform(k4, (1, OUT_FEATURES), jnp.float32, -bound2, bound2)
    return w1, b1, w2, b2


def reference_forward(x, w1, b1, w2, b2):
    """Pure-JAX reference applying the same bf16 casts on both matmuls."""
    x2 = x.reshape(-1, IN_FEATURES)
    h = jnp.dot(x2.astype(jnp.bfloat16), w1.astype(jnp.bfloat16),
                preferred_element_type=jnp.float32) + b1
    h = jnp.where(h > 0, h, 0.01 * h)
    return jnp.dot(h.astype(jnp.bfloat16), w2.astype(jnp.bfloat16),
                   preferred_element_type=jnp.float32) + b2


if __name__ == "__main__":
    key = jax.random.PRNGKey(0)
    kx, kp = jax.random.split(key)
    # Batch of 10 feature vectors of size 512 (exercises the ragged-batch path;
    # x.view(-1, 512) is a no-op on this shape).
    x = jax.random.normal(kx, (10, IN_FEATURES), jnp.float32)
    w1, b1, w2, b2 = init_params(kp)

    out = my_network_forward(x, w1, b1, w2, b2)
    out = jax.block_until_ready(out)

    ref = reference_forward(x, w1, b1, w2, b2)
    assert out.shape == (10, OUT_FEATURES), out.shape
    assert jnp.allclose(out, ref, atol=2e-3, rtol=2e-3), \
        f"max err {jnp.max(jnp.abs(out - ref))}"
    print("KERNEL_OK")
</pallas_src>

<mosaic_0001>
module attributes {stable_mosaic.version = 11 : i64} {
  func.func @_mlp_kernel(%arg0: i32, %arg1: memref<16x512xf32, #tpu.memory_space<vmem>>, %arg2: memref<512x256xbf16, #tpu.memory_space<vmem>>, %arg3: memref<1x256xf32, #tpu.memory_space<vmem>>, %arg4: memref<256x128xbf16, #tpu.memory_space<vmem>>, %arg5: memref<1x128xf32, #tpu.memory_space<vmem>>, %arg6: memref<16x128xf32, #tpu.memory_space<vmem>>) attributes {dimension_semantics = [#tpu.dimension_semantics<parallel>], iteration_bounds = array<i64: 1>, scalar_prefetch = 0 : i64, scratch_operands = 0 : i64, tpu.core_type = #tpu.core_type<tc>, window_params = [{transform_indices = @transform_0, window_bounds = array<i64: 16, 512>}, {pipeline_mode = #tpu.pipeline_mode<synchronous>, transform_indices = @transform_1, window_bounds = array<i64: 512, 256>}, {pipeline_mode = #tpu.pipeline_mode<synchronous>, transform_indices = @transform_2, window_bounds = array<i64: 1, 256>}, {pipeline_mode = #tpu.pipeline_mode<synchronous>, transform_indices = @transform_3, window_bounds = array<i64: 256, 128>}, {pipeline_mode = #tpu.pipeline_mode<synchronous>, transform_indices = @transform_4, window_bounds = array<i64: 1, 128>}, {transform_indices = @transform_5, window_bounds = array<i64: 16, 128>}]} {
    %c0 = arith.constant 0 : index
    %c0_0 = arith.constant 0 : index
    %0 = vector.load %arg1[%c0, %c0_0] : memref<16x512xf32, #tpu.memory_space<vmem>>, vector<16x512xf32>
    %1 = arith.truncf %0 : vector<16x512xf32> to vector<16x512xbf16>
    %c0_1 = arith.constant 0 : index
    %c0_2 = arith.constant 0 : index
    %2 = vector.load %arg2[%c0_1, %c0_2] : memref<512x256xbf16, #tpu.memory_space<vmem>>, vector<512x256xbf16>
    %cst = arith.constant dense<0.000000e+00> : vector<16x256xf32>
    %3 = tpu.matmul %1, %2, %cst {dimension_numbers = #tpu.dot_dimension_numbers<[1], [0], [0], [1], [0, 0, 1, 1], [], []>} : vector<16x512xbf16>, vector<512x256xbf16>, vector<16x256xf32> -> vector<16x256xf32>
    %c0_3 = arith.constant 0 : index
    %c0_4 = arith.constant 0 : index
    %4 = vector.load %arg3[%c0_3, %c0_4] : memref<1x256xf32, #tpu.memory_space<vmem>>, vector<1x256xf32>
    %5 = vector.broadcast %4 : vector<1x256xf32> to vector<16x256xf32>
    %6 = arith.addf %3, %5 : vector<16x256xf32>
    %cst_5 = arith.constant 0.000000e+00 : f32
    %7 = vector.broadcast %cst_5 : f32 to vector<16x256xf32>
    %8 = arith.cmpf ogt, %6, %7 : vector<16x256xf32>
    %cst_6 = arith.constant 0.00999999977 : f32
    %9 = vector.broadcast %cst_6 : f32 to vector<16x256xf32>
    %10 = arith.mulf %9, %6 : vector<16x256xf32>
    %11 = arith.select %8, %6, %10 : vector<16x256xi1>, vector<16x256xf32>
    %12 = arith.truncf %11 : vector<16x256xf32> to vector<16x256xbf16>
    %c0_7 = arith.constant 0 : index
    %c0_8 = arith.constant 0 : index
    %13 = vector.load %arg4[%c0_7, %c0_8] : memref<256x128xbf16, #tpu.memory_space<vmem>>, vector<256x128xbf16>
    %cst_9 = arith.constant dense<0.000000e+00> : vector<16x128xf32>
    %14 = tpu.matmul %12, %13, %cst_9 {dimension_numbers = #tpu.dot_dimension_numbers<[1], [0], [0], [1], [0, 0, 1, 1], [], []>} : vector<16x256xbf16>, vector<256x128xbf16>, vector<16x128xf32> -> vector<16x128xf32>
    %c0_10 = arith.constant 0 : index
    %c0_11 = arith.constant 0 : index
    %15 = vector.load %arg5[%c0_10, %c0_11] : memref<1x128xf32, #tpu.memory_space<vmem>>, vector<1x128xf32>
    %16 = vector.broadcast %15 : vector<1x128xf32> to vector<16x128xf32>
    %17 = arith.addf %14, %16 : vector<16x128xf32>
    %c0_12 = arith.constant 0 : index
    %c0_13 = arith.constant 0 : index
    %18 = vector.load %arg6[%c0_12, %c0_13] : memref<16x128xf32, #tpu.memory_space<vmem>>, vector<16x128xf32>
    tpu.vector_store %arg6[%c0_12, %c0_13], %17 {strides = array<i32>} : memref<16x128xf32, #tpu.memory_space<vmem>>, vector<16x128xf32>,
    return
  }
  func.func @transform_0(%arg0: i32) -> (i32, i32) {
    %c0_i32 = arith.constant 0 : i32
    %c0_i32_0 = arith.constant 0 : i32
    return %arg0, %c0_i32 : i32, i32
  }
  func.func @transform_1(%arg0: i32) -> (i32, i32) {
    %c0_i32 = arith.constant 0 : i32
    %c0_i32_0 = arith.constant 0 : i32
    %c0_i32_1 = arith.constant 0 : i32
    return %c0_i32, %c0_i32_0 : i32, i32
  }
  func.func @transform_2(%arg0: i32) -> (i32, i32) {
    %c0_i32 = arith.constant 0 : i32
    %c0_i32_0 = arith.constant 0 : i32
    %c0_i32_1 = arith.constant 0 : i32
    return %c0_i32, %c0_i32_0 : i32, i32
  }
  func.func @transform_3(%arg0: i32) -> (i32, i32) {
    %c0_i32 = arith.constant 0 : i32
    %c0_i32_0 = arith.constant 0 : i32
    %c0_i32_1 = arith.constant 0 : i32
    return %c0_i32, %c0_i32_0 : i32, i32
  }
  func.func @transform_4(%arg0: i32) -> (i32, i32) {
    %c0_i32 = arith.constant 0 : i32
    %c0_i32_0 = arith.constant 0 : i32
    %c0_i32_1 = arith.constant 0 : i32
    return %c0_i32, %c0_i32_0 : i32, i32
  }
  func.func @transform_5(%arg0: i32) -> (i32, i32) {
    %c0_i32 = arith.constant 0 : i32
    %c0_i32_0 = arith.constant 0 : i32
    return %arg0, %c0_i32 : i32, i32
  }
}

</mosaic_0001>

<llo_original>
// kernel: tpu_custom_call.1
$region0: #{tpu_custom_call.1}
  #allocation0 [shape = 'u32[]', space=smem, size = 0x4, offset = 0x4, fixed_abs, tag = 'smem constant byte address 0x4 - core index']
  #allocation1 [shape = 'u32[144,128]{1,0:T(1,128)}', space=vmem, size = 0x12000, scoped, tag = 'internal scratch']
  %s0 = inlined_call_operand.hbm [shape: f32[16,512], index: 0, kind: input, shape index: {}]
  %s1 = inlined_call_operand.hbm [shape: bf16[512,256], index: 1, kind: input, shape index: {}]
  %s2 = inlined_call_operand.vmem [shape: f32[1,256], index: 2, kind: input, shape index: {}]
  %s3 = inlined_call_operand.hbm [shape: bf16[256,128], index: 3, kind: input, shape index: {}]
  %s4 = inlined_call_operand.vmem [shape: f32[1,128], index: 4, kind: input, shape index: {}]
  %s5 = inlined_call_operand.hbm [shape: f32[16,128], index: 5, kind: output, shape index: {}]
  %s6 = sld [smem:[#allocation0]]
  $region42: #{tpu_custom_call.1} parent=0
    _
  %s8 = ssub.s32 1, %s6
  %s9 = scalar_select 0, %s8, %s6
  $region1: #{tpu_custom_call.1} parent=0
    #allocation2 [shape = 'u8[32768]{0}', space=vmem, size = 0x8000, scoped, tag = 'input window, operand 0, single buffered']
    #allocation3 [shape = 's32[1]{0}', space=sflag, size = 0x4, scoped, tag = 'scoped memory for tpu_custom_call.1']
    #allocation4 [shape = 's32[1]{0}', space=sflag, size = 0x4, scoped, tag = 'scoped memory for tpu_custom_call.1']
    #allocation5 [shape = 'u8[262144]{0}', space=vmem, size = 0x40000, scoped, tag = 'input window, operand 1, single buffered']
    #allocation6 [shape = 's32[1]{0}', space=sflag, size = 0x4, scoped, tag = 'scoped memory for tpu_custom_call.1']
    #allocation7 [shape = 'u8[65536]{0}', space=vmem, size = 0x10000, scoped, tag = 'input window, operand 3, single buffered']
    #allocation8 [shape = 'u8[8192]{0}', space=vmem, size = 0x2000, scoped, tag = 'output window, operand 0, single buffered']
    %10 = vsyncpa [#allocation3], 0
    %11 = vsyncpa [#allocation6], 0
    %12 = vsyncpa [#allocation4], 0
    // Predicated region
    $region2: #{tpu_custom_call.1} parent=1 // pred_check
      _
    $region3: #{tpu_custom_call.1} parent=1 // pred_check_branch
      %14 = sbr.rel (0) target = $region5
    $region4: #{tpu_custom_call.1} parent=1 // pred_region
      %s16 = ssub.s32 1024, 1024
      %17 = vsyncadd [#allocation3], %s16
      %s18 = sshll.u32 [#allocation2], 4
      %s19 = int_to_ptr.vmem [resolvable:$true] %s18
      %24 = dma.hbm_to_vmem [thread:$0]  %s0, 1024, %s19, [#allocation3], 512, 512, 32
    $region5: #{tpu_custom_call.1} parent=1 // pred_fallthru
      _
    // Predicated region
    $region6: #{tpu_custom_call.1} parent=1 // pred_check
      _
    $region7: #{tpu_custom_call.1} parent=1 // pred_check_branch
      %26 = sbr.rel (0) target = $region9
    $region8: #{tpu_custom_call.1} parent=1 // pred_region
      %s28 = ssub.s32 8192, 8192
      %29 = vsyncadd [#allocation6], %s28
      %s30 = sshll.u32 [#allocation5], 4
      %s31 = int_to_ptr.vmem [resolvable:$true] %s30
      %36 = dma.hbm_to_vmem [thread:$0]  %s1, 8192, %s31, [#allocation6], 128, 128, 8
    $region9: #{tpu_custom_call.1} parent=1 // pred_fallthru
      _
    // Predicated region
    $region10: #{tpu_custom_call.1} parent=1 // pred_check
      _
    $region11: #{tpu_custom_call.1} parent=1 // pred_check_branch
      %38 = sbr.rel (0) target = $region13
    $region12: #{tpu_custom_call.1} parent=1 // pred_region
      _
    $region13: #{tpu_custom_call.1} parent=1 // pred_fallthru
      _
    // Predicated region
    $region14: #{tpu_custom_call.1} parent=1 // pred_check
      _
    $region15: #{tpu_custom_call.1} parent=1 // pred_check_branch
      %40 = sbr.rel (0) target = $region17
    $region16: #{tpu_custom_call.1} parent=1 // pred_region
      %s42 = ssub.s32 2048, 2048
      %43 = vsyncadd [#allocation6], %s42
      %s44 = sshll.u32 [#allocation7], 4
      %s45 = int_to_ptr.vmem [resolvable:$true] %s44
      %50 = dma.hbm_to_vmem [thread:$0]  %s3, 2048, %s45, [#allocation6], 64, 64, 4
    $region17: #{tpu_custom_call.1} parent=1 // pred_fallthru
      _
    // Predicated region
    $region18: #{tpu_custom_call.1} parent=1 // pred_check
      _
    $region19: #{tpu_custom_call.1} parent=1 // pred_check_branch
      %52 = sbr.rel (0) target = $region21
    $region20: #{tpu_custom_call.1} parent=1 // pred_region
      _
    $region21: #{tpu_custom_call.1} parent=1 // pred_fallthru
      _
    // Predicated region
    $region22: #{tpu_custom_call.1} parent=1 // pred_check
      _
    $region23: #{tpu_custom_call.1} parent=1 // pred_check_branch
      %54 = sbr.rel (0) target = $region25
    $region24: #{tpu_custom_call.1} parent=1 // pred_region
      %55 = dma.done [#allocation3], 1024
    $region25: #{tpu_custom_call.1} parent=1 // pred_fallthru
      _
    // Predicated region
    $region26: #{tpu_custom_call.1} parent=1 // pred_check
      _
    $region27: #{tpu_custom_call.1} parent=1 // pred_check_branch
      %57 = sbr.rel (0) target = $region29
    $region28: #{tpu_custom_call.1} parent=1 // pred_region
      %58 = dma.done [#allocation6], 8192
    $region29: #{tpu_custom_call.1} parent=1 // pred_fallthru
      _
    // Predicated region
    $region30: #{tpu_custom_call.1} parent=1 // pred_check
      _
    $region31: #{tpu_custom_call.1} parent=1 // pred_check_branch
      %60 = sbr.rel (0) target = $region33
    $region32: #{tpu_custom_call.1} parent=1 // pred_region
      %61 = dma.done [#allocation6], 2048
    $region33: #{tpu_custom_call.1} parent=1 // pred_fallthru
      _
    %v63 = vld [vmem:[#allocation2] sm:$0xff]
    %v64 = vld [vmem:[#allocation2 + $0x8] sm:$0xff]
    %v65 = vld [vmem:[#allocation2 + $0x10] sm:$0xff]
    %v66 = vld [vmem:[#allocation2 + $0x18] sm:$0xff]
    %v67 = vld [vmem:[#allocation2 + $0x20] sm:$0xff]
    %v68 = vld [vmem:[#allocation2 + $0x28] sm:$0xff]
    %v69 = vld [vmem:[#allocation2 + $0x30] sm:$0xff]
    %v70 = vld [vmem:[#allocation2 + $0x38] sm:$0xff]
    %v71 = vpack.c.bf16 %v67, %v63
    %v72 = vpack.c.bf16 %v68, %v64
    %v73 = vpack.c.bf16 %v69, %v65
    %v74 = vpack.c.bf16 %v70, %v66
    %v75 = vld [vmem:[#allocation5] sm:$0xff]
    %v76 = vld [vmem:[#allocation5 + $0x8] sm:$0xff]
    %v77 = vld [vmem:[#allocation5 + $0x10] sm:$0xff]
    %v78 = vld [vmem:[#allocation5 + $0x18] sm:$0xff]
    %v79 = vld [vmem:[#allocation5 + $0x20] sm:$0xff]
    %v80 = vld [vmem:[#allocation5 + $0x28] sm:$0xff]
    %v81 = vld [vmem:[#allocation5 + $0x30] sm:$0xff]
    %v82 = vld [vmem:[#allocation5 + $0x38] sm:$0xff]
    %v83 = vld [vmem:[#allocation5 + $0x40] sm:$0xff]
    %v84 = vld [vmem:[#allocation5 + $0x48] sm:$0xff]
    %v85 = vld [vmem:[#allocation5 + $0x50] sm:$0xff]
    %v86 = vld [vmem:[#allocation5 + $0x58] sm:$0xff]
    %v87 = vld [vmem:[#allocation5 + $0x60] sm:$0xff]
    %v88 = vld [vmem:[#allocation5 + $0x68] sm:$0xff]
    %v89 = vld [vmem:[#allocation5 + $0x70] sm:$0xff]
    %v90 = vld [vmem:[#allocation5 + $0x78] sm:$0xff]
    %v91 = vld [vmem:[#allocation5 + $0x80] sm:$0xff]
    %v92 = vld [vmem:[#allocation5 + $0x88] sm:$0xff]
    %v93 = vld [vmem:[#allocation5 + $0x90] sm:$0xff]
    %v94 = vld [vmem:[#allocation5 + $0x98] sm:$0xff]
    %v95 = vld [vmem:[#allocation5 + $0xa0] sm:$0xff]
    %v96 = vld [vmem:[#allocation5 + $0xa8] sm:$0xff]
    %v97 = vld [vmem:[#allocation5 + $0xb0] sm:$0xff]
    %v98 = vld [vmem:[#allocation5 + $0xb8] sm:$0xff]
    %v99 = vld [vmem:[#allocation5 + $0xc0] sm:$0xff]
    %v100 = vld [vmem:[#allocation5 + $0xc8] sm:$0xff]
    %v101 = vld [vmem:[#allocation5 + $0xd0] sm:$0xff]
    %v102 = vld [vmem:[#allocation5 + $0xd8] sm:$0xff]
    %v103 = vld [vmem:[#allocation5 + $0xe0] sm:$0xff]
    %v104 = vld [vmem:[#allocation5 + $0xe8] sm:$0xff]
    %v105 = vld [vmem:[#allocation5 + $0xf0] sm:$0xff]
    %v106 = vld [vmem:[#allocation5 + $0xf8] sm:$0xff]
    %v107 = vld [vmem:[#allocation5 + $0x100] sm:$0xff]
    %v108 = vld [vmem:[#allocation5 + $0x108] sm:$0xff]
    %v109 = vld [vmem:[#allocation5 + $0x110] sm:$0xff]
    %v110 = vld [vmem:[#allocation5 + $0x118] sm:$0xff]
    %v111 = vld [vmem:[#allocation5 + $0x120] sm:$0xff]
    %v112 = vld [vmem:[#allocation5 + $0x128] sm:$0xff]
    %v113 = vld [vmem:[#allocation5 + $0x130] sm:$0xff]
    %v114 = vld [vmem:[#allocation5 + $0x138] sm:$0xff]
    %v115 = vld [vmem:[#allocation5 + $0x140] sm:$0xff]
    %v116 = vld [vmem:[#allocation5 + $0x148] sm:$0xff]
    %v117 = vld [vmem:[#allocation5 + $0x150] sm:$0xff]
    %v118 = vld [vmem:[#allocation5 + $0x158] sm:$0xff]
    %v119 = vld [vmem:[#allocation5 + $0x160] sm:$0xff]
    %v120 = vld [vmem:[#allocation5 + $0x168] sm:$0xff]
    %v121 = vld [vmem:[#allocation5 + $0x170] sm:$0xff]
    %v122 = vld [vmem:[#allocation5 + $0x178] sm:$0xff]
    %v123 = vld [vmem:[#allocation5 + $0x180] sm:$0xff]
    %v124 = vld [vmem:[#allocation5 + $0x188] sm:$0xff]
    %v125 = vld [vmem:[#allocation5 + $0x190] sm:$0xff]
    %v126 = vld [vmem:[#allocation5 + $0x198] sm:$0xff]
    %v127 = vld [vmem:[#allocation5 + $0x1a0] sm:$0xff]
    %v128 = vld [vmem:[#allocation5 + $0x1a8] sm:$0xff]
    %v129 = vld [vmem:[#allocation5 + $0x1b0] sm:$0xff]
    %v130 = vld [vmem:[#allocation5 + $0x1b8] sm:$0xff]
    %v131 = vld [vmem:[#allocation5 + $0x1c0] sm:$0xff]
    %v132 = vld [vmem:[#allocation5 + $0x1c8] sm:$0xff]
    %v133 = vld [vmem:[#allocation5 + $0x1d0] sm:$0xff]
    %v134 = vld [vmem:[#allocation5 + $0x1d8] sm:$0xff]
    %v135 = vld [vmem:[#allocation5 + $0x1e0] sm:$0xff]
    %v136 = vld [vmem:[#allocation5 + $0x1e8] sm:$0xff]
    %v137 = vld [vmem:[#allocation5 + $0x1f0] sm:$0xff]
    %v138 = vld [vmem:[#allocation5 + $0x1f8] sm:$0xff]
    %v139 = vld [vmem:[%s2] sm:$0x3]
    %v141 = vlaneseq
    %v142 = vshrl.u32 %v141, 7
    %v143 = vsub.s32 0, %v142
    %v144 = vrot.slane %v139, %v143
    %v145 = vlaneseq
    %v146 = vshrl.u32 %v145, 7
    %v147 = vsub.s32 1, %v146
    %v148 = vrot.slane %v139, %v147
    %v215 = vunpack.c.l.b16 %v75
    %v216 = vunpack.c.h.b16 %v75
    %v217 = vunpack.c.l.b16 %v76
    %v218 = vunpack.c.h.b16 %v76
    %v219 = vunpack.c.l.b16 %v77
    %v220 = vunpack.c.h.b16 %v77
    %v221 = vunpack.c.l.b16 %v78
    %v222 = vunpack.c.h.b16 %v78
    %v223 = vunpack.c.l.b16 %v79
    %v224 = vunpack.c.h.b16 %v79
    %v225 = vunpack.c.l.b16 %v80
    %v226 = vunpack.c.h.b16 %v80
    %v227 = vunpack.c.l.b16 %v81
    %v228 = vunpack.c.h.b16 %v81
    %v229 = vunpack.c.l.b16 %v82
    %v230 = vunpack.c.h.b16 %v82
    %v231 = vunpack.c.l.b16 %v83
    %v232 = vunpack.c.h.b16 %v83
    %v233 = vunpack.c.l.b16 %v84
    %v234 = vunpack.c.h.b16 %v84
    %v235 = vunpack.c.l.b16 %v85
    %v236 = vunpack.c.h.b16 %v85
    %v237 = vunpack.c.l.b16 %v86
    %v238 = vunpack.c.h.b16 %v86
    %v239 = vunpack.c.l.b16 %v87
    %v240 = vunpack.c.h.b16 %v87
    %v241 = vunpack.c.l.b16 %v88
    %v242 = vunpack.c.h.b16 %v88
    %v243 = vunpack.c.l.b16 %v89
    %v244 = vunpack.c.h.b16 %v89
    %v245 = vunpack.c.l.b16 %v90
    %v246 = vunpack.c.h.b16 %v90
    %v247 = vunpack.c.l.b16 %v91
    %v248 = vunpack.c.h.b16 %v91
    %v249 = vunpack.c.l.b16 %v92
    %v250 = vunpack.c.h.b16 %v92
    %v251 = vunpack.c.l.b16 %v93
    %v252 = vunpack.c.h.b16 %v93
    %v253 = vunpack.c.l.b16 %v94
    %v254 = vunpack.c.h.b16 %v94
    %v255 = vunpack.c.l.b16 %v95
    %v256 = vunpack.c.h.b16 %v95
    %v257 = vunpack.c.l.b16 %v96
    %v258 = vunpack.c.h.b16 %v96
    %v259 = vunpack.c.l.b16 %v97
    %v260 = vunpack.c.h.b16 %v97
    %v261 = vunpack.c.l.b16 %v98
    %v262 = vunpack.c.h.b16 %v98
    %v263 = vunpack.c.l.b16 %v99
    %v264 = vunpack.c.h.b16 %v99
    %v265 = vunpack.c.l.b16 %v100
    %v266 = vunpack.c.h.b16 %v100
    %v267 = vunpack.c.l.b16 %v101
    %v268 = vunpack.c.h.b16 %v101
    %v269 = vunpack.c.l.b16 %v102
    %v270 = vunpack.c.h.b16 %v102
    %v271 = vunpack.c.l.b16 %v103
    %v272 = vunpack.c.h.b16 %v103
    %v273 = vunpack.c.l.b16 %v104
    %v274 = vunpack.c.h.b16 %v104
    %v275 = vunpack.c.l.b16 %v105
    %v276 = vunpack.c.h.b16 %v105
    %v277 = vunpack.c.l.b16 %v106
    %v278 = vunpack.c.h.b16 %v106
    %v279 = vunpack.c.l.b16 %v107
    %v280 = vunpack.c.h.b16 %v107
    %v281 = vunpack.c.l.b16 %v108
    %v282 = vunpack.c.h.b16 %v108
    %v283 = vunpack.c.l.b16 %v109
    %v284 = vunpack.c.h.b16 %v109
    %v285 = vunpack.c.l.b16 %v110
    %v286 = vunpack.c.h.b16 %v110
    %v287 = vunpack.c.l.b16 %v111
    %v288 = vunpack.c.h.b16 %v111
    %v289 = vunpack.c.l.b16 %v112
    %v290 = vunpack.c.h.b16 %v112
    %v291 = vunpack.c.l.b16 %v113
    %v292 = vunpack.c.h.b16 %v113
    %v293 = vunpack.c.l.b16 %v114
    %v294 = vunpack.c.h.b16 %v114
    %v295 = vunpack.c.l.b16 %v115
    %v296 = vunpack.c.h.b16 %v115
    %v297 = vunpack.c.l.b16 %v116
    %v298 = vunpack.c.h.b16 %v116
    %v299 = vunpack.c.l.b16 %v117
    %v300 = vunpack.c.h.b16 %v117
    %v301 = vunpack.c.l.b16 %v118
    %v302 = vunpack.c.h.b16 %v118
    %v303 = vunpack.c.l.b16 %v119
    %v304 = vunpack.c.h.b16 %v119
    %v305 = vunpack.c.l.b16 %v120
    %v306 = vunpack.c.h.b16 %v120
    %v307 = vunpack.c.l.b16 %v121
    %v308 = vunpack.c.h.b16 %v121
    %v309 = vunpack.c.l.b16 %v122
    %v310 = vunpack.c.h.b16 %v122
    %v311 = vunpack.c.l.b16 %v123
    %v312 = vunpack.c.h.b16 %v123
    %v313 = vunpack.c.l.b16 %v124
    %v314 = vunpack.c.h.b16 %v124
    %v315 = vunpack.c.l.b16 %v125
    %v316 = vunpack.c.h.b16 %v125
    %v317 = vunpack.c.l.b16 %v126
    %v318 = vunpack.c.h.b16 %v126
    %v319 = vunpack.c.l.b16 %v127
    %v320 = vunpack.c.h.b16 %v127
    %v321 = vunpack.c.l.b16 %v128
    %v322 = vunpack.c.h.b16 %v128
    %v323 = vunpack.c.l.b16 %v129
    %v324 = vunpack.c.h.b16 %v129
    %v325 = vunpack.c.l.b16 %v130
    %v326 = vunpack.c.h.b16 %v130
    %v327 = vunpack.c.l.b16 %v131
    %v328 = vunpack.c.h.b16 %v131
    %v329 = vunpack.c.l.b16 %v132
    %v330 = vunpack.c.h.b16 %v132
    %v331 = vunpack.c.l.b16 %v133
    %v332 = vunpack.c.h.b16 %v133
    %v333 = vunpack.c.l.b16 %v134
    %v334 = vunpack.c.h.b16 %v134
    %v335 = vunpack.c.l.b16 %v135
    %v336 = vunpack.c.h.b16 %v135
    %v337 = vunpack.c.l.b16 %v136
    %v338 = vunpack.c.h.b16 %v136
    %v339 = vunpack.c.l.b16 %v137
    %v340 = vunpack.c.h.b16 %v137
    %v341 = vunpack.c.l.b16 %v138
    %v342 = vunpack.c.h.b16 %v138
    %v343 = vpack.c.b16 %v217, %v215
    %v344 = vpack.c.b16 %v218, %v216
    %v345 = vpack.c.b16 %v221, %v219
    %v346 = vpack.c.b16 %v222, %v220
    %v347 = vpack.c.b16 %v225, %v223
    %v348 = vpack.c.b16 %v226, %v224
    %v349 = vpack.c.b16 %v229, %v227
    %v350 = vpack.c.b16 %v230, %v228
    %v351 = vpack.c.b16 %v233, %v231
    %v352 = vpack.c.b16 %v234, %v232
    %v353 = vpack.c.b16 %v237, %v235
    %v354 = vpack.c.b16 %v238, %v236
    %v355 = vpack.c.b16 %v241, %v239
    %v356 = vpack.c.b16 %v242, %v240
    %v357 = vpack.c.b16 %v245, %v243
    %v358 = vpack.c.b16 %v246, %v244
    %v359 = vpack.c.b16 %v249, %v247
    %v360 = vpack.c.b16 %v250, %v248
    %v361 = vpack.c.b16 %v253, %v251
    %v362 = vpack.c.b16 %v254, %v252
    %v363 = vpack.c.b16 %v257, %v255
    %v364 = vpack.c.b16 %v258, %v256
    %v365 = vpack.c.b16 %v261, %v259
    %v366 = vpack.c.b16 %v262, %v260
    %v367 = vpack.c.b16 %v265, %v263
    %v368 = vpack.c.b16 %v266, %v264
    %v369 = vpack.c.b16 %v269, %v267
    %v370 = vpack.c.b16 %v270, %v268
    %v371 = vpack.c.b16 %v273, %v271
    %v372 = vpack.c.b16 %v274, %v272
    %v373 = vpack.c.b16 %v277, %v275
    %v374 = vpack.c.b16 %v278, %v276
    %v375 = vpack.c.b16 %v281, %v279
    %v376 = vpack.c.b16 %v282, %v280
    %v377 = vpack.c.b16 %v285, %v283
    %v378 = vpack.c.b16 %v286, %v284
    %v379 = vpack.c.b16 %v289, %v287
    %v380 = vpack.c.b16 %v290, %v288
    %v381 = vpack.c.b16 %v293, %v291
    %v382 = vpack.c.b16 %v294, %v292
    %v383 = vpack.c.b16 %v297, %v295
    %v384 = vpack.c.b16 %v298, %v296
    %v385 = vpack.c.b16 %v301, %v299
    %v386 = vpack.c.b16 %v302, %v300
    %v387 = vpack.c.b16 %v305, %v303
    %v388 = vpack.c.b16 %v306, %v304
    %v389 = vpack.c.b16 %v309, %v307
    %v390 = vpack.c.b16 %v310, %v308
    %v391 = vpack.c.b16 %v313, %v311
    %v392 = vpack.c.b16 %v314, %v312
    %v393 = vpack.c.b16 %v317, %v315
    %v394 = vpack.c.b16 %v318, %v316
    %v395 = vpack.c.b16 %v321, %v319
    %v396 = vpack.c.b16 %v322, %v320
    %v397 = vpack.c.b16 %v325, %v323
    %v398 = vpack.c.b16 %v326, %v324
    %v399 = vpack.c.b16 %v329, %v327
    %v400 = vpack.c.b16 %v330, %v328
    %v401 = vpack.c.b16 %v333, %v331
    %v402 = vpack.c.b16 %v334, %v332
    %v403 = vpack.c.b16 %v337, %v335
    %v404 = vpack.c.b16 %v338, %v336
    %v405 = vpack.c.b16 %v341, %v339
    %v406 = vpack.c.b16 %v342, %v340
    %471 = vmatprep.subr.bf16.mxu0 %v344
    %472 = vmatpush1.bf16.msra.mxu0 %v343
    %473 = vmatprep.subr.bf16.mxu0 %v346
    %474 = vmatpush1.bf16.msra.mxu0 %v345
    %475 = vmatprep.subr.bf16.mxu0 %v348
    %476 = vmatpush1.bf16.msra.mxu0 %v347
    %477 = vmatprep.subr.bf16.mxu0 %v350
    %478 = vmatpush1.bf16.msra.mxu0 %v349
    %479 = vmatprep.subr.bf16.mxu0 %v352
    %480 = vmatpush1.bf16.msra.mxu0 %v351
    %481 = vmatprep.subr.bf16.mxu0 %v354
    %482 = vmatpush1.bf16.msra.mxu0 %v353
    %483 = vmatprep.subr.bf16.mxu0 %v356
    %484 = vmatpush1.bf16.msra.mxu0 %v355
    %485 = vmatprep.subr.bf16.mxu0 %v358
    %486 = vmatpush1.bf16.msra.mxu0 %v357
    %487 = vmatprep.subr.bf16.mxu0 %v360
    %488 = vmatpush1.bf16.msra.mxu0 %v359
    %489 = vmatprep.subr.bf16.mxu0 %v362
    %490 = vmatpush1.bf16.msra.mxu0 %v361
    %491 = vmatprep.subr.bf16.mxu0 %v364
    %492 = vmatpush1.bf16.msra.mxu0 %v363
    %493 = vmatprep.subr.bf16.mxu0 %v366
    %494 = vmatpush1.bf16.msra.mxu0 %v365
    %495 = vmatprep.subr.bf16.mxu0 %v368
    %496 = vmatpush1.bf16.msra.mxu0 %v367
    %497 = vmatprep.subr.bf16.mxu0 %v370
    %498 = vmatpush1.bf16.msra.mxu0 %v369
    %499 = vmatprep.subr.bf16.mxu0 %v372
    %500 = vmatpush1.bf16.msra.mxu0 %v371
    %501 = vmatprep.subr.bf16.mxu0 %v374
    %502 = vmatpush1.bf16.msra.mxu0 %v373
    %503 = vmatprep.mubr.bf16.mxu0 %v72
    %504 = vmatmul.mubr.bf16.gmra.mrb[0].mxu0 %v71
    %v505 = vpop.f32.mrb[0].mxu0
    %v506 = vadd.f32 %v144, %v505
    %v507 = vpop.f32.mrb[0].mxu0
    %v508 = vadd.f32 %v148, %v507
    %v509 = vpop.f32.mrb[0].mxu0
    %v510 = vadd.f32 %v144, %v509
    %v511 = vpop.f32.mrb[0].mxu0
    %v512 = vadd.f32 %v148, %v511
    %513 = vdwg.mxu0
    %514 = vmatprep.subr.bf16.mxu0 %v376
    %515 = vmatpush1.bf16.msra.mxu0 %v375
    %516 = vmatprep.subr.bf16.mxu0 %v378
    %517 = vmatpush1.bf16.msra.mxu0 %v377
    %518 = vmatprep.subr.bf16.mxu0 %v380
    %519 = vmatpush1.bf16.msra.mxu0 %v379
    %520 = vmatprep.subr.bf16.mxu0 %v382
    %521 = vmatpush1.bf16.msra.mxu0 %v381
    %522 = vmatprep.subr.bf16.mxu0 %v384
    %523 = vmatpush1.bf16.msra.mxu0 %v383
    %524 = vmatprep.subr.bf16.mxu0 %v386
    %525 = vmatpush1.bf16.msra.mxu0 %v385
    %526 = vmatprep.subr.bf16.mxu0 %v388
    %527 = vmatpush1.bf16.msra.mxu0 %v387
    %528 = vmatprep.subr.bf16.mxu0 %v390
    %529 = vmatpush1.bf16.msra.mxu0 %v389
    %530 = vmatprep.subr.bf16.mxu0 %v392
    %531 = vmatpush1.bf16.msra.mxu0 %v391
    %532 = vmatprep.subr.bf16.mxu0 %v394
    %533 = vmatpush1.bf16.msra.mxu0 %v393
    %534 = vmatprep.subr.bf16.mxu0 %v396
    %535 = vmatpush1.bf16.msra.mxu0 %v395
    %536 = vmatprep.subr.bf16.mxu0 %v398
    %537 = vmatpush1.bf16.msra.mxu0 %v397
    %538 = vmatprep.subr.bf16.mxu0 %v400
    %539 = vmatpush1.bf16.msra.mxu0 %v399
    %540 = vmatprep.subr.bf16.mxu0 %v402
    %541 = vmatpush1.bf16.msra.mxu0 %v401
    %542 = vmatprep.subr.bf16.mxu0 %v404
    %543 = vmatpush1.bf16.msra.mxu0 %v403
    %544 = vmatprep.subr.bf16.mxu0 %v406
    %545 = vmatpush1.bf16.msra.mxu0 %v405
    %546 = vmatprep.mubr.bf16.mxu0 %v74
    %547 = vmatmul.mubr.bf16.gmra.mrb[0].mxu0 %v73
    %v548 = vpop.f32.mrb[0].mxu0
    %v549 = vadd.f32 %v506, %v548
    %v550 = vpop.f32.mrb[0].mxu0
    %v551 = vadd.f32 %v508, %v550
    %v552 = vpop.f32.mrb[0].mxu0
    %v553 = vadd.f32 %v510, %v552
    %v554 = vpop.f32.mrb[0].mxu0
    %v555 = vadd.f32 %v512, %v554
    %556 = vdwg.mxu0
    %vm557 = vcmp.gt.f32.partialorder %v549, 0.0
    %vm558 = vcmp.gt.f32.partialorder %v551, 0.0
    %vm559 = vcmp.gt.f32.partialorder %v553, 0.0
    %vm560 = vcmp.gt.f32.partialorder %v555, 0.0
    %v561 = vmul.f32 %v549, 0.01
    %v562 = vmul.f32 %v551, 0.01
    %v563 = vmul.f32 %v553, 0.01
    %v564 = vmul.f32 %v555, 0.01
    %v565 = vsel %vm557, %v549, %v561
    %v566 = vsel %vm558, %v551, %v562
    %v567 = vsel %vm559, %v553, %v563
    %v568 = vsel %vm560, %v555, %v564
    %v569 = vpack.c.bf16 %v567, %v565
    %v570 = vpack.c.bf16 %v568, %v566
    %v571 = vld [vmem:[#allocation7] sm:$0xf]
    %v572 = vld [vmem:[#allocation7 + $0x4] sm:$0xf]
    %v573 = vld [vmem:[#allocation7 + $0x8] sm:$0xf]
    %v574 = vld [vmem:[#allocation7 + $0xc] sm:$0xf]
    %v575 = vld [vmem:[#allocation7 + $0x10] sm:$0xf]
    %v576 = vld [vmem:[#allocation7 + $0x14] sm:$0xf]
    %v577 = vld [vmem:[#allocation7 + $0x18] sm:$0xf]
    %v578 = vld [vmem:[#allocation7 + $0x1c] sm:$0xf]
    %v579 = vld [vmem:[#allocation7 + $0x20] sm:$0xf]
    %v580 = vld [vmem:[#allocation7 + $0x24] sm:$0xf]
    %v581 = vld [vmem:[#allocation7 + $0x28] sm:$0xf]
    %v582 = vld [vmem:[#allocation7 + $0x2c] sm:$0xf]
    %v583 = vld [vmem:[#allocation7 + $0x30] sm:$0xf]
    %v584 = vld [vmem:[#allocation7 + $0x34] sm:$0xf]
    %v585 = vld [vmem:[#allocation7 + $0x38] sm:$0xf]
    %v586 = vld [vmem:[#allocation7 + $0x3c] sm:$0xf]
    %v587 = vld [vmem:[#allocation7 + $0x40] sm:$0xf]
    %v588 = vld [vmem:[#allocation7 + $0x44] sm:$0xf]
    %v589 = vld [vmem:[#allocation7 + $0x48] sm:$0xf]
    %v590 = vld [vmem:[#allocation7 + $0x4c] sm:$0xf]
    %v591 = vld [vmem:[#allocation7 + $0x50] sm:$0xf]
    %v592 = vld [vmem:[#allocation7 + $0x54] sm:$0xf]
    %v593 = vld [vmem:[#allocation7 + $0x58] sm:$0xf]
    %v594 = vld [vmem:[#allocation7 + $0x5c] sm:$0xf]
    %v595 = vld [vmem:[#allocation7 + $0x60] sm:$0xf]
    %v596 = vld [vmem:[#allocation7 + $0x64] sm:$0xf]
    %v597 = vld [vmem:[#allocation7 + $0x68] sm:$0xf]
    %v598 = vld [vmem:[#allocation7 + $0x6c] sm:$0xf]
    %v599 = vld [vmem:[#allocation7 + $0x70] sm:$0xf]
    %v600 = vld [vmem:[#allocation7 + $0x74] sm:$0xf]
    %v601 = vld [vmem:[#allocation7 + $0x78] sm:$0xf]
    %v602 = vld [vmem:[#allocation7 + $0x7c] sm:$0xf]
    %v603 = vld [vmem:[%s4] sm:$0x1]
    %v605 = vlaneseq
    %v606 = vshrl.u32 %v605, 7
    %v607 = vsub.s32 0, %v606
    %v608 = vrot.slane %v603, %v607
    %v642 = vunpack.c.l.b16 %v571
    %v643 = vunpack.c.l.b16 %v572
    %v644 = vunpack.c.l.b16 %v573
    %v645 = vunpack.c.l.b16 %v574
    %v646 = vunpack.c.l.b16 %v575
    %v647 = vunpack.c.l.b16 %v576
    %v648 = vunpack.c.l.b16 %v577
    %v649 = vunpack.c.l.b16 %v578
    %v650 = vunpack.c.l.b16 %v579
    %v651 = vunpack.c.l.b16 %v580
    %v652 = vunpack.c.l.b16 %v581
    %v653 = vunpack.c.l.b16 %v582
    %v654 = vunpack.c.l.b16 %v583
    %v655 = vunpack.c.l.b16 %v584
    %v656 = vunpack.c.l.b16 %v585
    %v657 = vunpack.c.l.b16 %v586
    %v658 = vunpack.c.l.b16 %v587
    %v659 = vunpack.c.l.b16 %v588
    %v660 = vunpack.c.l.b16 %v589
    %v661 = vunpack.c.l.b16 %v590
    %v662 = vunpack.c.l.b16 %v591
    %v663 = vunpack.c.l.b16 %v592
    %v664 = vunpack.c.l.b16 %v593
    %v665 = vunpack.c.l.b16 %v594
    %v666 = vunpack.c.l.b16 %v595
    %v667 = vunpack.c.l.b16 %v596
    %v668 = vunpack.c.l.b16 %v597
    %v669 = vunpack.c.l.b16 %v598
    %v670 = vunpack.c.l.b16 %v599
    %v671 = vunpack.c.l.b16 %v600
    %v672 = vunpack.c.l.b16 %v601
    %v673 = vunpack.c.l.b16 %v602
    %v674 = vpack.c.b16 %v643, %v642
    %v675 = vpack.c.b16 %v645, %v644
    %v676 = vpack.c.b16 %v647, %v646
    %v677 = vpack.c.b16 %v649, %v648
    %v678 = vpack.c.b16 %v651, %v650
    %v679 = vpack.c.b16 %v653, %v652
    %v680 = vpack.c.b16 %v655, %v654
    %v681 = vpack.c.b16 %v657, %v656
    %v682 = vpack.c.b16 %v659, %v658
    %v683 = vpack.c.b16 %v661, %v660
    %v684 = vpack.c.b16 %v663, %v662
    %v685 = vpack.c.b16 %v665, %v664
    %v686 = vpack.c.b16 %v667, %v666
    %v687 = vpack.c.b16 %v669, %v668
    %v688 = vpack.c.b16 %v671, %v670
    %v689 = vpack.c.b16 %v673, %v672
    %706 = vmatprep.subr.bf16.mxu0 0
    %707 = vmatpush1.bf16.msra.mxu0 %v674
    %708 = vmatprep.subr.bf16.mxu0 0
    %709 = vmatpush1.bf16.msra.mxu0 %v675
    %710 = vmatprep.subr.bf16.mxu0 0
    %711 = vmatpush1.bf16.msra.mxu0 %v676
    %712 = vmatprep.subr.bf16.mxu0 0
    %713 = vmatpush1.bf16.msra.mxu0 %v677
    %714 = vmatprep.subr.bf16.mxu0 0
    %715 = vmatpush1.bf16.msra.mxu0 %v678
    %716 = vmatprep.subr.bf16.mxu0 0
    %717 = vmatpush1.bf16.msra.mxu0 %v679
    %718 = vmatprep.subr.bf16.mxu0 0
    %719 = vmatpush1.bf16.msra.mxu0 %v680
    %720 = vmatprep.subr.bf16.mxu0 0
    %721 = vmatpush1.bf16.msra.mxu0 %v681
    %722 = vmatprep.subr.bf16.mxu0 0
    %723 = vmatpush1.bf16.msra.mxu0 %v682
    %724 = vmatprep.subr.bf16.mxu0 0
    %725 = vmatpush1.bf16.msra.mxu0 %v683
    %726 = vmatprep.subr.bf16.mxu0 0
    %727 = vmatpush1.bf16.msra.mxu0 %v684
    %728 = vmatprep.subr.bf16.mxu0 0
    %729 = vmatpush1.bf16.msra.mxu0 %v685
    %730 = vmatprep.subr.bf16.mxu0 0
    %731 = vmatpush1.bf16.msra.mxu0 %v686
    %732 = vmatprep.subr.bf16.mxu0 0
    %733 = vmatpush1.bf16.msra.mxu0 %v687
    %734 = vmatprep.subr.bf16.mxu0 0
    %735 = vmatpush1.bf16.msra.mxu0 %v688
    %736 = vmatprep.subr.bf16.mxu0 0
    %737 = vmatpush1.bf16.msra.mxu0 %v689
    %738 = vmatprep.mubr.bf16.mxu0 %v570
    %739 = vmatmul.mubr.bf16.gmra.mrb[0].mxu0 %v569
    %v740 = vpop.f32.mrb[0].mxu0
    %v741 = vadd.f32 %v608, %v740
    %v742 = vpop.f32.mrb[0].mxu0
    %v743 = vpop.f32.mrb[0].mxu0
    %v744 = vadd.f32 %v608, %v743
    %v745 = vpop.f32.mrb[0].mxu0
    %746 = vdwg.mxu0
    %747 = vst [vmem:[#allocation8] sm:$0xff] %v741
    %748 = vst [vmem:[#allocation8 + $0x8] sm:$0xff] %v744
    // Predicated region
    $region34: #{tpu_custom_call.1} parent=1 // pred_check
      _
    $region35: #{tpu_custom_call.1} parent=1 // pred_check_branch
      %750 = sbr.rel (0) target = $region37
    $region36: #{tpu_custom_call.1} parent=1 // pred_region
      %s752 = ssub.s32 256, 256
      %753 = vsyncadd [#allocation4], %s752
      %s754 = sshll.u32 [#allocation8], 4
      %s755 = int_to_ptr.vmem [resolvable:$true] %s754
      %760 = dma.vmem_to_hbm [thread:$0]  %s755, 256, %s5, [#allocation4], 128, 128, 8
    $region37: #{tpu_custom_call.1} parent=1 // pred_fallthru
      _
    // Predicated region
    $region38: #{tpu_custom_call.1} parent=1 // pred_check
      _
    $region39: #{tpu_custom_call.1} parent=1 // pred_check_branch
      %762 = sbr.rel (0) target = $region41
    $region40: #{tpu_custom_call.1} parent=1 // pred_region
      %763 = dma.done [#allocation4], 256
    $region41: #{tpu_custom_call.1} parent=1 // pred_fallthru
      _
    %764 = vsyncpa [#allocation3], 1
    %765 = vsyncpa [#allocation6], 1
    %766 = vsyncpa [#allocation4], 1

</llo_original>
